<compile_context>
chip_gen: v7x
topology: tpu7x:2x2x1
jax: 0.10.0
libtpu: 0.0.40
codegen_flags: <defaults>
</compile_context>

<pallas_src>
import functools

import jax
import jax.numpy as jnp
from jax import lax
from jax.experimental import pallas as pl
from jax.experimental.pallas import tpu as pltpu

_NEG = -1e30  # finite "-inf" used for padded vocab columns / target-select masking


def _round_up(x, m):
    return ((x + m - 1) // m) * m


def _tile_nll_sum(logits, tgt, base, tile_n, vp, n_rows):
    """Sum of per-row NLL for one (tile_n, vp) logits tile -> (1, 1).

    Padded vocab columns already hold _NEG (pre-masked in the wrapper), so no
    column mask is needed here.
    """
    row_max = jnp.max(logits, axis=-1, keepdims=True)            # (tile_n, 1)
    shifted = logits - row_max
    lse = jnp.log(jnp.sum(jnp.exp(shifted), axis=-1, keepdims=True))

    # Target logit via fused select+max (no one-hot multiply + sum).
    col = lax.broadcasted_iota(jnp.int32, (tile_n, vp), 1)
    tgt_shift = jnp.max(jnp.where(col == tgt, shifted, _NEG),
                        axis=-1, keepdims=True)                  # (tile_n, 1)
    nll = lse - tgt_shift

    # Zero out rows that exist only because of N-padding.
    row = lax.broadcasted_iota(jnp.int32, (tile_n, 1), 0)
    nll = jnp.where((base + row) < n_rows, nll, 0.0)
    return jnp.sum(nll, axis=0, keepdims=True)                   # (1, 1)


# --------------------------------------------------------------------------- #
# Fast path: table resident in VMEM, gather via one-hot @ table on the MXU.
# --------------------------------------------------------------------------- #
def _bigram_vmem_kernel(ids_ref, tgt_ref, table_ref, logits_ref, loss_ref,
                        *, tile_n, vr, vp, n_rows):
    i = pl.program_id(0)
    base = i * tile_n

    ids = ids_ref[...]                                           # (tile_n, 1) i32
    row_iota = lax.broadcasted_iota(jnp.int32, (tile_n, vr), 1)
    onehot = (row_iota == ids).astype(jnp.float32)               # (tile_n, vr)

    # Exact embedding-row gather on the (otherwise idle) MXU. HIGHEST precision
    # keeps the f32 values bit-faithful (one-hot has exactly one 1.0 per row).
    logits = jnp.dot(onehot, table_ref[...],
                     preferred_element_type=jnp.float32,
                     precision=lax.Precision.HIGHEST)            # (tile_n, vp)
    logits_ref[...] = logits                                     # lane-dense store

    tile_sum = _tile_nll_sum(logits, tgt_ref[...], base, tile_n, vp, n_rows)
    loss_ref[...] = jnp.broadcast_to(tile_sum, loss_ref.shape)   # (8, 128)


# --------------------------------------------------------------------------- #
# Fallback path: table stays in HBM, per-row gather double-buffered across
# grid steps (ids come from SMEM via scalar prefetch to allow the lookahead).
# --------------------------------------------------------------------------- #
def _bigram_hbm_kernel(idx_sref, tgt_ref, table_hbm, logits_ref, loss_ref,
                       gather_buf, copy_sems, *, tile_n, vp, n_rows, num_tiles):
    i = pl.program_id(0)
    slot = i % 2

    def start_gather(tile, slot_):
        # TODO(synk): dedupe repeated token ids within a tile (small vocab,
        # large tile_n) so each unique table row is DMA'd only once.
        base_ = tile * tile_n

        @pl.loop(0, tile_n)
        def _(r):
            row = idx_sref[base_ + r]
            pltpu.make_async_copy(
                table_hbm.at[pl.ds(row, 1), :],
                gather_buf.at[slot_, pl.ds(r, 1), :],
                copy_sems.at[slot_],
            ).start()

    def wait_gather(slot_):
        @pl.loop(0, tile_n)
        def _(r):
            pltpu.make_async_copy(
                table_hbm.at[pl.ds(0, 1), :],
                gather_buf.at[slot_, pl.ds(0, 1), :],
                copy_sems.at[slot_],
            ).wait()

    # Prime the pipeline on the first step.
    @pl.when(i == 0)
    def _():
        start_gather(0, 0)

    # Issue next tile's row gathers before consuming the current tile, so the
    # HBM latency overlaps with this tile's softmax + logits writeback.
    @pl.when(i + 1 < num_tiles)
    def _():
        start_gather(i + 1, 1 - slot)

    wait_gather(slot)
    logits = gather_buf[slot]                                    # (tile_n, vp)
    logits_ref[...] = logits

    base = i * tile_n
    tile_sum = _tile_nll_sum(logits, tgt_ref[...], base, tile_n, vp, n_rows)
    loss_ref[...] = jnp.broadcast_to(tile_sum, loss_ref.shape)


# --------------------------------------------------------------------------- #
# Wrapper
# --------------------------------------------------------------------------- #
def bigram_forward(idx, targets, table, *, tile_n=None):
    """Forward pass of BigramLanguageModel.

    idx, targets: (B, T) integer token ids
    table:        (V, V) float32 embedding table
    Returns (logits of shape (B*T, V), scalar loss), like the PyTorch module.
    """
    B, T = idx.shape
    V = table.shape[0]
    N = B * T

    vp = _round_up(V, 128)   # vocab/class (lane) dim -> lane-dense, unmasked stores
    vr = _round_up(V, 128)   # table-row dim (MXU-friendly contraction dim)

    # Pre-mask padded classes in the wrapper: padded columns hold _NEG so the
    # kernel needs no column mask; padded rows are zeros and never selected.
    table_p = jnp.pad(table.astype(jnp.float32), ((0, 0), (0, vp - V)),
                      constant_values=_NEG)
    table_p = jnp.pad(table_p, ((0, vr - V), (0, 0)))
    # TODO(synk): optional bf16 table storage (halves HBM/VMEM bytes) — changes
    # numerics vs the f32 PyTorch reference, so left off by default.

    # ---- per-generation VMEM budgets (v7x: 64 MiB/TC, v5e/v6e: 128 MiB) ----
    try:
        phys_vmem = int(pltpu.get_tpu_info().vmem_capacity_bytes)
    except Exception:  # pragma: no cover - conservative fallback (v7x-sized)
        phys_vmem = 64 * 1024 * 1024
    budget = int(phys_vmem * 0.70)                          # ~45 MiB v7x, ~90 MiB v5e/v6e
    vmem_limit = min(int(phys_vmem * 0.80), phys_vmem - (8 << 20))

    table_bytes = vr * vp * 4
    loss_block_bytes = 2 * 8 * 128 * 4
    bytes_per_row = 2 * (vp * 4) + 4 * 4    # double-buffered logits block + ids/targets

    # Resident-table gate. The table block is grid-invariant, but we count it
    # twice in case the pipeliner still double-buffers its window.
    resident = (2 * table_bytes + 8 * bytes_per_row + loss_block_bytes) <= budget

    if tile_n is None:
        if resident:
            avail = budget - 2 * table_bytes - loss_block_bytes
        else:
            bytes_per_row += 2 * (vp * 4)   # (2, tile_n, vp) gather scratch
            avail = budget - loss_block_bytes
        tile_n = max(8, min(1024, avail // bytes_per_row, _round_up(N, 8)))
        tile_n = max(8, (tile_n // 8) * 8)
    assert tile_n % 8 == 0 and tile_n >= 8

    n_pad = _round_up(N, tile_n)
    num_tiles = n_pad // tile_n

    idx_flat = jnp.pad(idx.reshape(-1).astype(jnp.int32), (0, n_pad - N))
    ids_col = idx_flat.reshape(n_pad, 1)
    tgt_col = jnp.pad(targets.reshape(-1).astype(jnp.int32),
                      (0, n_pad - N)).reshape(n_pad, 1)

    out_shape = (
        jax.ShapeDtypeStruct((n_pad, vp), jnp.float32),          # logits
        jax.ShapeDtypeStruct((num_tiles * 8, 128), jnp.float32),  # loss partials
    )

    if resident:
        kernel = functools.partial(_bigram_vmem_kernel,
                                   tile_n=tile_n, vr=vr, vp=vp, n_rows=N)
        logits_p, loss_parts = pl.pallas_call(
            kernel,
            out_shape=out_shape,
            grid_spec=pltpu.PrefetchScalarGridSpec(
                num_scalar_prefetch=0,
                grid=(num_tiles,),
                in_specs=[
                    pl.BlockSpec((tile_n, 1), lambda i: (i, 0)),   # token ids
                    pl.BlockSpec((tile_n, 1), lambda i: (i, 0)),   # targets
                    pl.BlockSpec((vr, vp), lambda i: (0, 0)),      # resident table
                ],
                out_specs=(
                    pl.BlockSpec((tile_n, vp), lambda i: (i, 0)),  # logits
                    pl.BlockSpec((8, 128), lambda i: (i, 0)),      # loss partials
                ),
            ),
            # Row tiles are independent -> safe to shard across v7x TensorCores.
            compiler_params=pltpu.CompilerParams(
                dimension_semantics=("parallel",),
                vmem_limit_bytes=vmem_limit),
        )(ids_col, tgt_col, table_p)
    else:
        # TODO(synk): scalar-prefetching the full idx array pads SMEM to
        # next_pow2(4*n_pad) bytes; for very large B*T switch to a bounded
        # lookahead window instead of the whole array.
        kernel = functools.partial(_bigram_hbm_kernel,
                                   tile_n=tile_n, vp=vp, n_rows=N,
                                   num_tiles=num_tiles)
        logits_p, loss_parts = pl.pallas_call(
            kernel,
            out_shape=out_shape,
            grid_spec=pltpu.PrefetchScalarGridSpec(
                num_scalar_prefetch=1,                 # idx -> SMEM (gather lookahead)
                grid=(num_tiles,),
                in_specs=[
                    pl.BlockSpec((tile_n, 1), lambda i, idx_p: (i, 0)),  # targets
                    pl.BlockSpec(memory_space=pl.ANY),                   # table in HBM
                ],
                out_specs=(
                    pl.BlockSpec((tile_n, vp), lambda i, idx_p: (i, 0)),
                    pl.BlockSpec((8, 128), lambda i, idx_p: (i, 0)),
                ),
                scratch_shapes=[
                    pltpu.VMEM((2, tile_n, vp), jnp.float32),   # double-buffered gather
                    pltpu.SemaphoreType.DMA((2,)),              # one sem per slot
                ],
            ),
            # Cross-step double-buffer state lives in scratch -> keep sequential.
            compiler_params=pltpu.CompilerParams(
                dimension_semantics=("arbitrary",),
                vmem_limit_bytes=vmem_limit),
        )(idx_flat, tgt_col, table_p)

    logits = logits_p[:N, :V]                          # strip row/vocab padding
    loss = jnp.sum(loss_parts[::8, 0]) / jnp.float32(N)
    return logits, loss


if __name__ == "__main__":
    # Small deterministic problem: vocab_size=65 (char-level), batch=2, block_size=8.
    vocab_size = 65
    B, T = 2, 8

    key = jax.random.PRNGKey(0)
    k_table, k_idx, k_tgt = jax.random.split(key, 3)

    # nn.Embedding default init: N(0, 1)
    table = jax.random.normal(k_table, (vocab_size, vocab_size), dtype=jnp.float32)
    idx = jax.random.randint(k_idx, (B, T), 0, vocab_size, dtype=jnp.int32)
    targets = jax.random.randint(k_tgt, (B, T), 0, vocab_size, dtype=jnp.int32)

    logits, loss = bigram_forward(idx, targets, table)
    logits = jax.block_until_ready(logits)
    loss = jax.block_until_ready(loss)

    # Pure-JAX reference (embedding gather + softmax cross-entropy).
    ref_logits = table[idx.reshape(-1)]
    shifted = ref_logits - ref_logits.max(axis=-1, keepdims=True)
    ref_logp = shifted - jnp.log(jnp.exp(shifted).sum(axis=-1, keepdims=True))
    ref_loss = -ref_logp[jnp.arange(B * T), targets.reshape(-1)].mean()

    assert logits.shape == (B * T, vocab_size)
    assert jnp.allclose(logits, ref_logits, atol=1e-4, rtol=1e-4), (
        float(jnp.max(jnp.abs(logits - ref_logits))))
    assert jnp.allclose(loss, ref_loss, atol=1e-4, rtol=1e-4), (
        float(loss), float(ref_loss))

    print("KERNEL_OK")
</pallas_src>

<mosaic_0001>
module attributes {stable_mosaic.version = 11 : i64} {
  func.func @_bigram_vmem_kernel(%arg0: i32, %arg1: memref<16x1xi32, #tpu.memory_space<vmem>>, %arg2: memref<16x1xi32, #tpu.memory_space<vmem>>, %arg3: memref<128x128xf32, #tpu.memory_space<vmem>>, %arg4: memref<16x128xf32, #tpu.memory_space<vmem>>, %arg5: memref<8x128xf32, #tpu.memory_space<vmem>>) attributes {dimension_semantics = [#tpu.dimension_semantics<parallel>], iteration_bounds = array<i64: 1>, scalar_prefetch = 0 : i64, scratch_operands = 0 : i64, tpu.core_type = #tpu.core_type<tc>, window_params = [{transform_indices = @transform_0, window_bounds = array<i64: 16, 1>}, {transform_indices = @transform_1, window_bounds = array<i64: 16, 1>}, {pipeline_mode = #tpu.pipeline_mode<synchronous>, transform_indices = @transform_2, window_bounds = array<i64: 128, 128>}, {transform_indices = @transform_3, window_bounds = array<i64: 16, 128>}, {transform_indices = @transform_4, window_bounds = array<i64: 8, 128>}]} {
    %c16_i32 = arith.constant 16 : i32
    %0 = arith.muli %arg0, %c16_i32 : i32
    %c0 = arith.constant 0 : index
    %c0_0 = arith.constant 0 : index
    %1 = vector.load %arg1[%c0, %c0_0] : memref<16x1xi32, #tpu.memory_space<vmem>>, vector<16x1xi32>
    %2 = tpu.iota {dimensions = array<i32: 1>} : vector<16x128xi32>
    %3 = vector.broadcast %1 : vector<16x1xi32> to vector<16x128xi32>
    %4 = arith.cmpi eq, %2, %3 : vector<16x128xi32>
    %5 = arith.extui %4 : vector<16x128xi1> to vector<16x128xi32>
    %6 = arith.sitofp %5 : vector<16x128xi32> to vector<16x128xf32>
    %c0_1 = arith.constant 0 : index
    %c0_2 = arith.constant 0 : index
    %7 = vector.load %arg3[%c0_1, %c0_2] : memref<128x128xf32, #tpu.memory_space<vmem>>, vector<128x128xf32>
    %cst = arith.constant dense<0.000000e+00> : vector<16x128xf32>
    %8 = tpu.matmul %6, %7, %cst {dimension_numbers = #tpu.dot_dimension_numbers<[1], [0], [0], [1], [0, 0, 1, 1], [], []>, precision = #tpu.contract_precision<fp32>} : vector<16x128xf32>, vector<128x128xf32>, vector<16x128xf32> -> vector<16x128xf32>
    %c0_3 = arith.constant 0 : index
    %c0_4 = arith.constant 0 : index
    %9 = vector.load %arg4[%c0_3, %c0_4] : memref<16x128xf32, #tpu.memory_space<vmem>>, vector<16x128xf32>
    tpu.vector_store %arg4[%c0_3, %c0_4], %8 {strides = array<i32>} : memref<16x128xf32, #tpu.memory_space<vmem>>, vector<16x128xf32>,
    %c0_5 = arith.constant 0 : index
    %c0_6 = arith.constant 0 : index
    %10 = vector.load %arg2[%c0_5, %c0_6] : memref<16x1xi32, #tpu.memory_space<vmem>>, vector<16x1xi32>
    %cst_7 = arith.constant dense<0xFF800000> : vector<16xf32>
    %11 = vector.multi_reduction <maximumf>, %8, %cst_7 [1] : vector<16x128xf32> to vector<16xf32>
    %12 = vector.shape_cast %11 : vector<16xf32> to vector<16x1xf32>
    %13 = vector.broadcast %12 : vector<16x1xf32> to vector<16x128xf32>
    %14 = arith.subf %8, %13 : vector<16x128xf32>
    %15 = math.exp %14 : vector<16x128xf32>
    %cst_8 = arith.constant dense<0.000000e+00> : vector<16xf32>
    %16 = vector.multi_reduction <add>, %15, %cst_8 [1] : vector<16x128xf32> to vector<16xf32>
    %17 = vector.shape_cast %16 : vector<16xf32> to vector<16x1xf32>
    %18 = math.log %17 : vector<16x1xf32>
    %19 = tpu.iota {dimensions = array<i32: 1>} : vector<16x128xi32>
    %20 = vector.broadcast %10 : vector<16x1xi32> to vector<16x128xi32>
    %21 = arith.cmpi eq, %19, %20 : vector<16x128xi32>
    %cst_9 = arith.constant -1.000000e+30 : f32
    %22 = vector.broadcast %cst_9 : f32 to vector<16x128xf32>
    %23 = arith.select %21, %14, %22 : vector<16x128xi1>, vector<16x128xf32>
    %cst_10 = arith.constant dense<0xFF800000> : vector<16xf32>
    %24 = vector.multi_reduction <maximumf>, %23, %cst_10 [1] : vector<16x128xf32> to vector<16xf32>
    %25 = vector.shape_cast %24 : vector<16xf32> to vector<16x1xf32>
    %26 = arith.subf %18, %25 : vector<16x1xf32>
    %27 = tpu.iota {dimensions = array<i32: 0>} : vector<16x1xi32>
    %28 = vector.broadcast %0 : i32 to vector<16x1xi32>
    %29 = arith.addi %28, %27 : vector<16x1xi32>
    %c16_i32_11 = arith.constant 16 : i32
    %30 = vector.broadcast %c16_i32_11 : i32 to vector<16x1xi32>
    %31 = arith.cmpi slt, %29, %30 : vector<16x1xi32>
    %cst_12 = arith.constant 0.000000e+00 : f32
    %32 = vector.broadcast %cst_12 : f32 to vector<16x1xf32>
    %33 = arith.select %31, %26, %32 : vector<16x1xi1>, vector<16x1xf32>
    %cst_13 = arith.constant dense<0.000000e+00> : vector<1xf32>
    %34 = vector.multi_reduction <add>, %33, %cst_13 [0] : vector<16x1xf32> to vector<1xf32>
    %35 = vector.shape_cast %34 : vector<1xf32> to vector<1x1xf32>
    %36 = vector.shape_cast %35 : vector<1x1xf32> to vector<1x1xf32>
    %37 = vector.broadcast %36 : vector<1x1xf32> to vector<8x128xf32>
    %c0_14 = arith.constant 0 : index
    %c0_15 = arith.constant 0 : index
    %38 = vector.load %arg5[%c0_14, %c0_15] : memref<8x128xf32, #tpu.memory_space<vmem>>, vector<8x128xf32>
    tpu.vector_store %arg5[%c0_14, %c0_15], %37 {strides = array<i32>} : memref<8x128xf32, #tpu.memory_space<vmem>>, vector<8x128xf32>,
    return
  }
  func.func @transform_0(%arg0: i32) -> (i32, i32) {
    %c0_i32 = arith.constant 0 : i32
    %c0_i32_0 = arith.constant 0 : i32
    return %arg0, %c0_i32 : i32, i32
  }
  func.func @transform_1(%arg0: i32) -> (i32, i32) {
    %c0_i32 = arith.constant 0 : i32
    %c0_i32_0 = arith.constant 0 : i32
    return %arg0, %c0_i32 : i32, i32
  }
  func.func @transform_2(%arg0: i32) -> (i32, i32) {
    %c0_i32 = arith.constant 0 : i32
    %c0_i32_0 = arith.constant 0 : i32
    %c0_i32_1 = arith.constant 0 : i32
    return %c0_i32, %c0_i32_0 : i32, i32
  }
  func.func @transform_3(%arg0: i32) -> (i32, i32) {
    %c0_i32 = arith.constant 0 : i32
    %c0_i32_0 = arith.constant 0 : i32
    return %arg0, %c0_i32 : i32, i32
  }
  func.func @transform_4(%arg0: i32) -> (i32, i32) {
    %c0_i32 = arith.constant 0 : i32
    %c0_i32_0 = arith.constant 0 : i32
    return %arg0, %c0_i32 : i32, i32
  }
}

</mosaic_0001>

<llo_original>
// kernel: tpu_custom_call.1
$region0: #{tpu_custom_call.1}
  #allocation0 [shape = 'u32[]', space=smem, size = 0x4, offset = 0x4, fixed_abs, tag = 'smem constant byte address 0x4 - core index']
  #allocation1 [shape = 'u32[144,128]{1,0:T(1,128)}', space=vmem, size = 0x12000, scoped, tag = 'internal scratch']
  %s0 = inlined_call_operand.vmem [shape: s32[16,1], index: 0, kind: input, shape index: {}]
  %s1 = inlined_call_operand.vmem [shape: s32[16,1], index: 1, kind: input, shape index: {}]
  %s2 = inlined_call_operand.hbm [shape: f32[128,128], index: 2, kind: input, shape index: {}]
  %s3 = inlined_call_operand.hbm [shape: f32[16,128], index: 3, kind: output, shape index: {0}]
  %s4 = inlined_call_operand.hbm [shape: f32[8,128], index: 4, kind: output, shape index: {1}]
  %5 = xla_tuple %s3, %s4
  %s6 = sld [smem:[#allocation0]]
  $region34: #{tpu_custom_call.1} parent=0
    _
  %s8 = ssub.s32 1, %s6
  %s9 = scalar_select 0, %s8, %s6
  $region1: #{tpu_custom_call.1} parent=0
    #allocation2 [shape = 'u8[65536]{0}', space=vmem, size = 0x10000, scoped, tag = 'input window, operand 2, single buffered']
    #allocation3 [shape = 's32[1]{0}', space=sflag, size = 0x4, scoped, tag = 'scoped memory for tpu_custom_call.1']
    #allocation4 [shape = 's32[1]{0}', space=sflag, size = 0x4, scoped, tag = 'scoped memory for tpu_custom_call.1']
    #allocation5 [shape = 'u8[8192]{0}', space=vmem, size = 0x2000, scoped, tag = 'output window, operand 0, single buffered']
    #allocation6 [shape = 'u8[4096]{0}', space=vmem, size = 0x1000, scoped, tag = 'output window, operand 1, single buffered']
    #allocation7 [shape = 's32[1]{0}', space=sflag, size = 0x4, scoped, tag = 'scoped memory for tpu_custom_call.1']
    %10 = vsyncpa [#allocation3], 0
    %11 = vsyncpa [#allocation4], 0
    %12 = vsyncpa [#allocation7], 0
    // Predicated region
    $region2: #{tpu_custom_call.1} parent=1 // pred_check
      _
    $region3: #{tpu_custom_call.1} parent=1 // pred_check_branch
      %14 = sbr.rel (0) target = $region5
    $region4: #{tpu_custom_call.1} parent=1 // pred_region
      _
    $region5: #{tpu_custom_call.1} parent=1 // pred_fallthru
      _
    // Predicated region
    $region6: #{tpu_custom_call.1} parent=1 // pred_check
      _
    $region7: #{tpu_custom_call.1} parent=1 // pred_check_branch
      %16 = sbr.rel (0) target = $region9
    $region8: #{tpu_custom_call.1} parent=1 // pred_region
      _
    $region9: #{tpu_custom_call.1} parent=1 // pred_fallthru
      _
    // Predicated region
    $region10: #{tpu_custom_call.1} parent=1 // pred_check
      _
    $region11: #{tpu_custom_call.1} parent=1 // pred_check_branch
      %18 = sbr.rel (0) target = $region13
    $region12: #{tpu_custom_call.1} parent=1 // pred_region
      %s20 = ssub.s32 2048, 2048
      %21 = vsyncadd [#allocation3], %s20
      %s22 = sshll.u32 [#allocation2], 4
      %s23 = int_to_ptr.vmem [resolvable:$true] %s22
      %28 = dma.hbm_to_vmem [thread:$0]  %s2, 2048, %s23, [#allocation3], 128, 128, 8
    $region13: #{tpu_custom_call.1} parent=1 // pred_fallthru
      _
    // Predicated region
    $region14: #{tpu_custom_call.1} parent=1 // pred_check
      _
    $region15: #{tpu_custom_call.1} parent=1 // pred_check_branch
      %30 = sbr.rel (0) target = $region17
    $region16: #{tpu_custom_call.1} parent=1 // pred_region
      %31 = dma.done [#allocation3], 2048
    $region17: #{tpu_custom_call.1} parent=1 // pred_fallthru
      _
    %s32 = smul.u32 0, 16
    %v33 = vld [vmem:[%s0] sm:$0xff]
    %v34 = vld [vmem:[%s0 + $0x8] sm:$0xff]
    %v35 = vlaneseq
    %v36 = vand.u32 %v35, 127
    %37 = vset.pattern.permute.xlu0 0
    %38 = vperm.xlu0 %37, %v33
    %v39 = vpop.permute.xlu0 %38
    %40 = vset.pattern.permute.xlu0 0
    %41 = vperm.xlu0 %40, %v34
    %v42 = vpop.permute.xlu0 %41
    %vm43 = vcmp.eq.s32.totalorder %v36, %v39
    %vm44 = vcmp.eq.s32.totalorder %v36, %v42
    %v45 = vsel %vm43, 1, 0
    %v46 = vsel %vm44, 1, 0
    %v47 = vcvt.s32.f32 %v45
    %v48 = vcvt.s32.f32 %v46
    %v49 = vld [vmem:[#allocation2] sm:$0xff]
    %v50 = vld [vmem:[#allocation2 + $0x8] sm:$0xff]
    %v51 = vld [vmem:[#allocation2 + $0x10] sm:$0xff]
    %v52 = vld [vmem:[#allocation2 + $0x18] sm:$0xff]
    %v53 = vld [vmem:[#allocation2 + $0x20] sm:$0xff]
    %v54 = vld [vmem:[#allocation2 + $0x28] sm:$0xff]
    %v55 = vld [vmem:[#allocation2 + $0x30] sm:$0xff]
    %v56 = vld [vmem:[#allocation2 + $0x38] sm:$0xff]
    %v57 = vld [vmem:[#allocation2 + $0x40] sm:$0xff]
    %v58 = vld [vmem:[#allocation2 + $0x48] sm:$0xff]
    %v59 = vld [vmem:[#allocation2 + $0x50] sm:$0xff]
    %v60 = vld [vmem:[#allocation2 + $0x58] sm:$0xff]
    %v61 = vld [vmem:[#allocation2 + $0x60] sm:$0xff]
    %v62 = vld [vmem:[#allocation2 + $0x68] sm:$0xff]
    %v63 = vld [vmem:[#allocation2 + $0x70] sm:$0xff]
    %v64 = vld [vmem:[#allocation2 + $0x78] sm:$0xff]
    %65 = vmatprep.subr.mxu0 0.0
    %v66 = vand.u32 %v49, 4294901760
    %67 = vmatpush1.msra.mxu0 %v66
    %68 = vmatprep.subr.mxu0 0.0
    %v69 = vand.u32 %v50, 4294901760
    %70 = vmatpush1.msra.mxu0 %v69
    %71 = vmatprep.subr.mxu0 0.0
    %v72 = vand.u32 %v51, 4294901760
    %73 = vmatpush1.msra.mxu0 %v72
    %74 = vmatprep.subr.mxu0 0.0
    %v75 = vand.u32 %v52, 4294901760
    %76 = vmatpush1.msra.mxu0 %v75
    %77 = vmatprep.subr.mxu0 0.0
    %v78 = vand.u32 %v53, 4294901760
    %79 = vmatpush1.msra.mxu0 %v78
    %80 = vmatprep.subr.mxu0 0.0
    %v81 = vand.u32 %v54, 4294901760
    %82 = vmatpush1.msra.mxu0 %v81
    %83 = vmatprep.subr.mxu0 0.0
    %v84 = vand.u32 %v55, 4294901760
    %85 = vmatpush1.msra.mxu0 %v84
    %86 = vmatprep.subr.mxu0 0.0
    %v87 = vand.u32 %v56, 4294901760
    %88 = vmatpush1.msra.mxu0 %v87
    %89 = vmatprep.subr.mxu0 0.0
    %v90 = vand.u32 %v57, 4294901760
    %91 = vmatpush1.msra.mxu0 %v90
    %92 = vmatprep.subr.mxu0 0.0
    %v93 = vand.u32 %v58, 4294901760
    %94 = vmatpush1.msra.mxu0 %v93
    %95 = vmatprep.subr.mxu0 0.0
    %v96 = vand.u32 %v59, 4294901760
    %97 = vmatpush1.msra.mxu0 %v96
    %98 = vmatprep.subr.mxu0 0.0
    %v99 = vand.u32 %v60, 4294901760
    %100 = vmatpush1.msra.mxu0 %v99
    %101 = vmatprep.subr.mxu0 0.0
    %v102 = vand.u32 %v61, 4294901760
    %103 = vmatpush1.msra.mxu0 %v102
    %104 = vmatprep.subr.mxu0 0.0
    %v105 = vand.u32 %v62, 4294901760
    %106 = vmatpush1.msra.mxu0 %v105
    %107 = vmatprep.subr.mxu0 0.0
    %v108 = vand.u32 %v63, 4294901760
    %109 = vmatpush1.msra.mxu0 %v108
    %110 = vmatprep.subr.mxu0 0.0
    %v111 = vand.u32 %v64, 4294901760
    %112 = vmatpush1.msra.mxu0 %v111
    %113 = vmatprep.subr.mxu0 0.0
    %114 = vmatpush1.msra.mxu0 0.0
    %115 = vmatprep.subr.mxu0 0.0
    %116 = vmatpush1.msra.mxu0 0.0
    %117 = vmatprep.subr.mxu0 0.0
    %118 = vmatpush1.msra.mxu0 0.0
    %119 = vmatprep.subr.mxu0 0.0
    %120 = vmatpush1.msra.mxu0 0.0
    %121 = vmatprep.subr.mxu0 0.0
    %122 = vmatpush1.msra.mxu0 0.0
    %123 = vmatprep.subr.mxu0 0.0
    %124 = vmatpush1.msra.mxu0 0.0
    %125 = vmatprep.subr.mxu0 0.0
    %126 = vmatpush1.msra.mxu0 0.0
    %127 = vmatprep.subr.mxu0 0.0
    %128 = vmatpush1.msra.mxu0 0.0
    %129 = vmatprep.subr.mxu0 0.0
    %130 = vmatpush1.msra.mxu0 0.0
    %131 = vmatprep.subr.mxu0 0.0
    %132 = vmatpush1.msra.mxu0 0.0
    %133 = vmatprep.subr.mxu0 0.0
    %134 = vmatpush1.msra.mxu0 0.0
    %135 = vmatprep.subr.mxu0 0.0
    %136 = vmatpush1.msra.mxu0 0.0
    %137 = vmatprep.subr.mxu0 0.0
    %138 = vmatpush1.msra.mxu0 0.0
    %139 = vmatprep.subr.mxu0 0.0
    %140 = vmatpush1.msra.mxu0 0.0
    %141 = vmatprep.subr.mxu0 0.0
    %142 = vmatpush1.msra.mxu0 0.0
    %143 = vmatprep.subr.mxu0 0.0
    %144 = vmatpush1.msra.mxu0 0.0
    %145 = vmatprep.mubr.f32.mxu0 0.0
    %v146 = vand.u32 %v47, 4294901760
    %v147 = vsub.f32 %v47, %v146
    %v148 = vand.u32 %v147, 4294901760
    %v149 = vsub.f32 %v147, %v148
    %v150 = vand.u32 %v149, 4294901760
    %151 = vmatmul.mubr.f32.gmra.mrb[0].mxu0 %v150
    %v152 = vpop.f32.mrb[0].mxu0
    %v153 = vadd.f32 0.0, %v152
    %v154 = vpop.f32.mrb[0].mxu0
    %155 = vmatprep.mubr.f32.mxu0 0.0
    %v156 = vand.u32 %v48, 4294901760
    %v157 = vsub.f32 %v48, %v156
    %v158 = vand.u32 %v157, 4294901760
    %v159 = vsub.f32 %v157, %v158
    %v160 = vand.u32 %v159, 4294901760
    %161 = vmatmul.mubr.f32.gmra.mrb[0].mxu0 %v160
    %v162 = vpop.f32.mrb[0].mxu0
    %v163 = vadd.f32 0.0, %v162
    %v164 = vpop.f32.mrb[0].mxu0
    %165 = vdwg.mxu0
    %166 = vmatprep.subr.mxu0 0.0
    %v167 = vand.u32 %v49, 4294901760
    %v168 = vsub.f32 %v49, %v167
    %v169 = vand.u32 %v168, 4294901760
    %v170 = vsub.f32 %v168, %v169
    %v171 = vand.u32 %v170, 4294901760
    %172 = vmatpush1.msra.mxu0 %v171
    %173 = vmatprep.subr.mxu0 0.0
    %v174 = vand.u32 %v50, 4294901760
    %v175 = vsub.f32 %v50, %v174
    %v176 = vand.u32 %v175, 4294901760
    %v177 = vsub.f32 %v175, %v176
    %v178 = vand.u32 %v177, 4294901760
    %179 = vmatpush1.msra.mxu0 %v178
    %180 = vmatprep.subr.mxu0 0.0
    %v181 = vand.u32 %v51, 4294901760
    %v182 = vsub.f32 %v51, %v181
    %v183 = vand.u32 %v182, 4294901760
    %v184 = vsub.f32 %v182, %v183
    %v185 = vand.u32 %v184, 4294901760
    %186 = vmatpush1.msra.mxu0 %v185
    %187 = vmatprep.subr.mxu0 0.0
    %v188 = vand.u32 %v52, 4294901760
    %v189 = vsub.f32 %v52, %v188
    %v190 = vand.u32 %v189, 4294901760
    %v191 = vsub.f32 %v189, %v190
    %v192 = vand.u32 %v191, 4294901760
    %193 = vmatpush1.msra.mxu0 %v192
    %194 = vmatprep.subr.mxu0 0.0
    %v195 = vand.u32 %v53, 4294901760
    %v196 = vsub.f32 %v53, %v195
    %v197 = vand.u32 %v196, 4294901760
    %v198 = vsub.f32 %v196, %v197
    %v199 = vand.u32 %v198, 4294901760
    %200 = vmatpush1.msra.mxu0 %v199
    %201 = vmatprep.subr.mxu0 0.0
    %v202 = vand.u32 %v54, 4294901760
    %v203 = vsub.f32 %v54, %v202
    %v204 = vand.u32 %v203, 4294901760
    %v205 = vsub.f32 %v203, %v204
    %v206 = vand.u32 %v205, 4294901760
    %207 = vmatpush1.msra.mxu0 %v206
    %208 = vmatprep.subr.mxu0 0.0
    %v209 = vand.u32 %v55, 4294901760
    %v210 = vsub.f32 %v55, %v209
    %v211 = vand.u32 %v210, 4294901760
    %v212 = vsub.f32 %v210, %v211
    %v213 = vand.u32 %v212, 4294901760
    %214 = vmatpush1.msra.mxu0 %v213
    %215 = vmatprep.subr.mxu0 0.0
    %v216 = vand.u32 %v56, 4294901760
    %v217 = vsub.f32 %v56, %v216
    %v218 = vand.u32 %v217, 4294901760
    %v219 = vsub.f32 %v217, %v218
    %v220 = vand.u32 %v219, 4294901760
    %221 = vmatpush1.msra.mxu0 %v220
    %222 = vmatprep.subr.mxu0 0.0
    %v223 = vand.u32 %v57, 4294901760
    %v224 = vsub.f32 %v57, %v223
    %v225 = vand.u32 %v224, 4294901760
    %v226 = vsub.f32 %v224, %v225
    %v227 = vand.u32 %v226, 4294901760
    %228 = vmatpush1.msra.mxu0 %v227
    %229 = vmatprep.subr.mxu0 0.0
    %v230 = vand.u32 %v58, 4294901760
    %v231 = vsub.f32 %v58, %v230
    %v232 = vand.u32 %v231, 4294901760
    %v233 = vsub.f32 %v231, %v232
    %v234 = vand.u32 %v233, 4294901760
    %235 = vmatpush1.msra.mxu0 %v234
    %236 = vmatprep.subr.mxu0 0.0
    %v237 = vand.u32 %v59, 4294901760
    %v238 = vsub.f32 %v59, %v237
    %v239 = vand.u32 %v238, 4294901760
    %v240 = vsub.f32 %v238, %v239
    %v241 = vand.u32 %v240, 4294901760
    %242 = vmatpush1.msra.mxu0 %v241
    %243 = vmatprep.subr.mxu0 0.0
    %v244 = vand.u32 %v60, 4294901760
    %v245 = vsub.f32 %v60, %v244
    %v246 = vand.u32 %v245, 4294901760
    %v247 = vsub.f32 %v245, %v246
    %v248 = vand.u32 %v247, 4294901760
    %249 = vmatpush1.msra.mxu0 %v248
    %250 = vmatprep.subr.mxu0 0.0
    %v251 = vand.u32 %v61, 4294901760
    %v252 = vsub.f32 %v61, %v251
    %v253 = vand.u32 %v252, 4294901760
    %v254 = vsub.f32 %v252, %v253
    %v255 = vand.u32 %v254, 4294901760
    %256 = vmatpush1.msra.mxu0 %v255
    %257 = vmatprep.subr.mxu0 0.0
    %v258 = vand.u32 %v62, 4294901760
    %v259 = vsub.f32 %v62, %v258
    %v260 = vand.u32 %v259, 4294901760
    %v261 = vsub.f32 %v259, %v260
    %v262 = vand.u32 %v261, 4294901760
    %263 = vmatpush1.msra.mxu0 %v262
    %264 = vmatprep.subr.mxu0 0.0
    %v265 = vand.u32 %v63, 4294901760
    %v266 = vsub.f32 %v63, %v265
    %v267 = vand.u32 %v266, 4294901760
    %v268 = vsub.f32 %v266, %v267
    %v269 = vand.u32 %v268, 4294901760
    %270 = vmatpush1.msra.mxu0 %v269
    %271 = vmatprep.subr.mxu0 0.0
    %v272 = vand.u32 %v64, 4294901760
    %v273 = vsub.f32 %v64, %v272
    %v274 = vand.u32 %v273, 4294901760
    %v275 = vsub.f32 %v273, %v274
    %v276 = vand.u32 %v275, 4294901760
    %277 = vmatpush1.msra.mxu0 %v276
    %278 = vmatprep.subr.mxu0 0.0
    %279 = vmatpush1.msra.mxu0 0.0
    %280 = vmatprep.subr.mxu0 0.0
    %281 = vmatpush1.msra.mxu0 0.0
    %282 = vmatprep.subr.mxu0 0.0
    %283 = vmatpush1.msra.mxu0 0.0
    %284 = vmatprep.subr.mxu0 0.0
    %285 = vmatpush1.msra.mxu0 0.0
    %286 = vmatprep.subr.mxu0 0.0
    %287 = vmatpush1.msra.mxu0 0.0
    %288 = vmatprep.subr.mxu0 0.0
    %289 = vmatpush1.msra.mxu0 0.0
    %290 = vmatprep.subr.mxu0 0.0
    %291 = vmatpush1.msra.mxu0 0.0
    %292 = vmatprep.subr.mxu0 0.0
    %293 = vmatpush1.msra.mxu0 0.0
    %294 = vmatprep.subr.mxu0 0.0
    %295 = vmatpush1.msra.mxu0 0.0
    %296 = vmatprep.subr.mxu0 0.0
    %297 = vmatpush1.msra.mxu0 0.0
    %298 = vmatprep.subr.mxu0 0.0
    %299 = vmatpush1.msra.mxu0 0.0
    %300 = vmatprep.subr.mxu0 0.0
    %301 = vmatpush1.msra.mxu0 0.0
    %302 = vmatprep.subr.mxu0 0.0
    %303 = vmatpush1.msra.mxu0 0.0
    %304 = vmatprep.subr.mxu0 0.0
    %305 = vmatpush1.msra.mxu0 0.0
    %306 = vmatprep.subr.mxu0 0.0
    %307 = vmatpush1.msra.mxu0 0.0
    %308 = vmatprep.subr.mxu0 0.0
    %309 = vmatpush1.msra.mxu0 0.0
    %310 = vmatprep.mubr.f32.mxu0 0.0
    %v311 = vand.u32 %v47, 4294901760
    %312 = vmatmul.mubr.f32.gmra.mrb[0].mxu0 %v311
    %v313 = vpop.f32.mrb[0].mxu0
    %v314 = vadd.f32 %v153, %v313
    %v315 = vpop.f32.mrb[0].mxu0
    %316 = vmatprep.mubr.f32.mxu0 0.0
    %v317 = vand.u32 %v48, 4294901760
    %318 = vmatmul.mubr.f32.gmra.mrb[0].mxu0 %v317
    %v319 = vpop.f32.mrb[0].mxu0
    %v320 = vadd.f32 %v163, %v319
    %v321 = vpop.f32.mrb[0].mxu0
    %322 = vdwg.mxu0
    %323 = vmatprep.subr.mxu0 0.0
    %v324 = vand.u32 %v49, 4294901760
    %v325 = vsub.f32 %v49, %v324
    %326 = vmatpush1.msra.mxu0 %v325
    %327 = vmatprep.subr.mxu0 0.0
    %v328 = vand.u32 %v50, 4294901760
    %v329 = vsub.f32 %v50, %v328
    %330 = vmatpush1.msra.mxu0 %v329
    %331 = vmatprep.subr.mxu0 0.0
    %v332 = vand.u32 %v51, 4294901760
    %v333 = vsub.f32 %v51, %v332
    %334 = vmatpush1.msra.mxu0 %v333
    %335 = vmatprep.subr.mxu0 0.0
    %v336 = vand.u32 %v52, 4294901760
    %v337 = vsub.f32 %v52, %v336
    %338 = vmatpush1.msra.mxu0 %v337
    %339 = vmatprep.subr.mxu0 0.0
    %v340 = vand.u32 %v53, 4294901760
    %v341 = vsub.f32 %v53, %v340
    %342 = vmatpush1.msra.mxu0 %v341
    %343 = vmatprep.subr.mxu0 0.0
    %v344 = vand.u32 %v54, 4294901760
    %v345 = vsub.f32 %v54, %v344
    %346 = vmatpush1.msra.mxu0 %v345
    %347 = vmatprep.subr.mxu0 0.0
    %v348 = vand.u32 %v55, 4294901760
    %v349 = vsub.f32 %v55, %v348
    %350 = vmatpush1.msra.mxu0 %v349
    %351 = vmatprep.subr.mxu0 0.0
    %v352 = vand.u32 %v56, 4294901760
    %v353 = vsub.f32 %v56, %v352
    %354 = vmatpush1.msra.mxu0 %v353
    %355 = vmatprep.subr.mxu0 0.0
    %v356 = vand.u32 %v57, 4294901760
    %v357 = vsub.f32 %v57, %v356
    %358 = vmatpush1.msra.mxu0 %v357
    %359 = vmatprep.subr.mxu0 0.0
    %v360 = vand.u32 %v58, 4294901760
    %v361 = vsub.f32 %v58, %v360
    %362 = vmatpush1.msra.mxu0 %v361
    %363 = vmatprep.subr.mxu0 0.0
    %v364 = vand.u32 %v59, 4294901760
    %v365 = vsub.f32 %v59, %v364
    %366 = vmatpush1.msra.mxu0 %v365
    %367 = vmatprep.subr.mxu0 0.0
    %v368 = vand.u32 %v60, 4294901760
    %v369 = vsub.f32 %v60, %v368
    %370 = vmatpush1.msra.mxu0 %v369
    %371 = vmatprep.subr.mxu0 0.0
    %v372 = vand.u32 %v61, 4294901760
    %v373 = vsub.f32 %v61, %v372
    %374 = vmatpush1.msra.mxu0 %v373
    %375 = vmatprep.subr.mxu0 0.0
    %v376 = vand.u32 %v62, 4294901760
    %v377 = vsub.f32 %v62, %v376
    %378 = vmatpush1.msra.mxu0 %v377
    %379 = vmatprep.subr.mxu0 0.0
    %v380 = vand.u32 %v63, 4294901760
    %v381 = vsub.f32 %v63, %v380
    %382 = vmatpush1.msra.mxu0 %v381
    %383 = vmatprep.subr.mxu0 0.0
    %v384 = vand.u32 %v64, 4294901760
    %v385 = vsub.f32 %v64, %v384
    %386 = vmatpush1.msra.mxu0 %v385
    %387 = vmatprep.subr.mxu0 0.0
    %388 = vmatpush1.msra.mxu0 0.0
    %389 = vmatprep.subr.mxu0 0.0
    %390 = vmatpush1.msra.mxu0 0.0
    %391 = vmatprep.subr.mxu0 0.0
    %392 = vmatpush1.msra.mxu0 0.0
    %393 = vmatprep.subr.mxu0 0.0
    %394 = vmatpush1.msra.mxu0 0.0
    %395 = vmatprep.subr.mxu0 0.0
    %396 = vmatpush1.msra.mxu0 0.0
    %397 = vmatprep.subr.mxu0 0.0
    %398 = vmatpush1.msra.mxu0 0.0
    %399 = vmatprep.subr.mxu0 0.0
    %400 = vmatpush1.msra.mxu0 0.0
    %401 = vmatprep.subr.mxu0 0.0
    %402 = vmatpush1.msra.mxu0 0.0
    %403 = vmatprep.subr.mxu0 0.0
    %404 = vmatpush1.msra.mxu0 0.0
    %405 = vmatprep.subr.mxu0 0.0
    %406 = vmatpush1.msra.mxu0 0.0
    %407 = vmatprep.subr.mxu0 0.0
    %408 = vmatpush1.msra.mxu0 0.0
    %409 = vmatprep.subr.mxu0 0.0
    %410 = vmatpush1.msra.mxu0 0.0
    %411 = vmatprep.subr.mxu0 0.0
    %412 = vmatpush1.msra.mxu0 0.0
    %413 = vmatprep.subr.mxu0 0.0
    %414 = vmatpush1.msra.mxu0 0.0
    %415 = vmatprep.subr.mxu0 0.0
    %416 = vmatpush1.msra.mxu0 0.0
    %417 = vmatprep.subr.mxu0 0.0
    %418 = vmatpush1.msra.mxu0 0.0
    %419 = vmatprep.mubr.f32.mxu0 0.0
    %v420 = vand.u32 %v47, 4294901760
    %v421 = vsub.f32 %v47, %v420
    %422 = vmatmul.mubr.f32.gmra.mrb[0].mxu0 %v421
    %v423 = vpop.f32.mrb[0].mxu0
    %v424 = vadd.f32 %v314, %v423
    %v425 = vpop.f32.mrb[0].mxu0
    %426 = vmatprep.mubr.f32.mxu0 0.0
    %v427 = vand.u32 %v48, 4294901760
    %v428 = vsub.f32 %v48, %v427
    %429 = vmatmul.mubr.f32.gmra.mrb[0].mxu0 %v428
    %v430 = vpop.f32.mrb[0].mxu0
    %v431 = vadd.f32 %v320, %v430
    %v432 = vpop.f32.mrb[0].mxu0
    %433 = vdwg.mxu0
    %434 = vmatprep.subr.mxu0 0.0
    %v435 = vand.u32 %v49, 4294901760
    %436 = vmatpush1.msra.mxu0 %v435
    %437 = vmatprep.subr.mxu0 0.0
    %v438 = vand.u32 %v50, 4294901760
    %439 = vmatpush1.msra.mxu0 %v438
    %440 = vmatprep.subr.mxu0 0.0
    %v441 = vand.u32 %v51, 4294901760
    %442 = vmatpush1.msra.mxu0 %v441
    %443 = vmatprep.subr.mxu0 0.0
    %v444 = vand.u32 %v52, 4294901760
    %445 = vmatpush1.msra.mxu0 %v444
    %446 = vmatprep.subr.mxu0 0.0
    %v447 = vand.u32 %v53, 4294901760
    %448 = vmatpush1.msra.mxu0 %v447
    %449 = vmatprep.subr.mxu0 0.0
    %v450 = vand.u32 %v54, 4294901760
    %451 = vmatpush1.msra.mxu0 %v450
    %452 = vmatprep.subr.mxu0 0.0
    %v453 = vand.u32 %v55, 4294901760
    %454 = vmatpush1.msra.mxu0 %v453
    %455 = vmatprep.subr.mxu0 0.0
    %v456 = vand.u32 %v56, 4294901760
    %457 = vmatpush1.msra.mxu0 %v456
    %458 = vmatprep.subr.mxu0 0.0
    %v459 = vand.u32 %v57, 4294901760
    %460 = vmatpush1.msra.mxu0 %v459
    %461 = vmatprep.subr.mxu0 0.0
    %v462 = vand.u32 %v58, 4294901760
    %463 = vmatpush1.msra.mxu0 %v462
    %464 = vmatprep.subr.mxu0 0.0
    %v465 = vand.u32 %v59, 4294901760
    %466 = vmatpush1.msra.mxu0 %v465
    %467 = vmatprep.subr.mxu0 0.0
    %v468 = vand.u32 %v60, 4294901760
    %469 = vmatpush1.msra.mxu0 %v468
    %470 = vmatprep.subr.mxu0 0.0
    %v471 = vand.u32 %v61, 4294901760
    %472 = vmatpush1.msra.mxu0 %v471
    %473 = vmatprep.subr.mxu0 0.0
    %v474 = vand.u32 %v62, 4294901760
    %475 = vmatpush1.msra.mxu0 %v474
    %476 = vmatprep.subr.mxu0 0.0
    %v477 = vand.u32 %v63, 4294901760
    %478 = vmatpush1.msra.mxu0 %v477
    %479 = vmatprep.subr.mxu0 0.0
    %v480 = vand.u32 %v64, 4294901760
    %481 = vmatpush1.msra.mxu0 %v480
    %482 = vmatprep.subr.mxu0 0.0
    %483 = vmatpush1.msra.mxu0 0.0
    %484 = vmatprep.subr.mxu0 0.0
    %485 = vmatpush1.msra.mxu0 0.0
    %486 = vmatprep.subr.mxu0 0.0
    %487 = vmatpush1.msra.mxu0 0.0
    %488 = vmatprep.subr.mxu0 0.0
    %489 = vmatpush1.msra.mxu0 0.0
    %490 = vmatprep.subr.mxu0 0.0
    %491 = vmatpush1.msra.mxu0 0.0
    %492 = vmatprep.subr.mxu0 0.0
    %493 = vmatpush1.msra.mxu0 0.0
    %494 = vmatprep.subr.mxu0 0.0
    %495 = vmatpush1.msra.mxu0 0.0
    %496 = vmatprep.subr.mxu0 0.0
    %497 = vmatpush1.msra.mxu0 0.0
    %498 = vmatprep.subr.mxu0 0.0
    %499 = vmatpush1.msra.mxu0 0.0
    %500 = vmatprep.subr.mxu0 0.0
    %501 = vmatpush1.msra.mxu0 0.0
    %502 = vmatprep.subr.mxu0 0.0
    %503 = vmatpush1.msra.mxu0 0.0
    %504 = vmatprep.subr.mxu0 0.0
    %505 = vmatpush1.msra.mxu0 0.0
    %506 = vmatprep.subr.mxu0 0.0
    %507 = vmatpush1.msra.mxu0 0.0
    %508 = vmatprep.subr.mxu0 0.0
    %509 = vmatpush1.msra.mxu0 0.0
    %510 = vmatprep.subr.mxu0 0.0
    %511 = vmatpush1.msra.mxu0 0.0
    %512 = vmatprep.subr.mxu0 0.0
    %513 = vmatpush1.msra.mxu0 0.0
    %514 = vmatprep.mubr.f32.mxu0 0.0
    %v515 = vand.u32 %v47, 4294901760
    %v516 = vsub.f32 %v47, %v515
    %v517 = vand.u32 %v516, 4294901760
    %518 = vmatmul.mubr.f32.gmra.mrb[0].mxu0 %v517
    %v519 = vpop.f32.mrb[0].mxu0
    %v520 = vadd.f32 %v424, %v519
    %v521 = vpop.f32.mrb[0].mxu0
    %522 = vmatprep.mubr.f32.mxu0 0.0
    %v523 = vand.u32 %v48, 4294901760
    %v524 = vsub.f32 %v48, %v523
    %v525 = vand.u32 %v524, 4294901760
    %526 = vmatmul.mubr.f32.gmra.mrb[0].mxu0 %v525
    %v527 = vpop.f32.mrb[0].mxu0
    %v528 = vadd.f32 %v431, %v527
    %v529 = vpop.f32.mrb[0].mxu0
    %530 = vdwg.mxu0
    %531 = vmatprep.subr.mxu0 0.0
    %v532 = vand.u32 %v49, 4294901760
    %v533 = vsub.f32 %v49, %v532
    %v534 = vand.u32 %v533, 4294901760
    %535 = vmatpush1.msra.mxu0 %v534
    %536 = vmatprep.subr.mxu0 0.0
    %v537 = vand.u32 %v50, 4294901760
    %v538 = vsub.f32 %v50, %v537
    %v539 = vand.u32 %v538, 4294901760
    %540 = vmatpush1.msra.mxu0 %v539
    %541 = vmatprep.subr.mxu0 0.0
    %v542 = vand.u32 %v51, 4294901760
    %v543 = vsub.f32 %v51, %v542
    %v544 = vand.u32 %v543, 4294901760
    %545 = vmatpush1.msra.mxu0 %v544
    %546 = vmatprep.subr.mxu0 0.0
    %v547 = vand.u32 %v52, 4294901760
    %v548 = vsub.f32 %v52, %v547
    %v549 = vand.u32 %v548, 4294901760
    %550 = vmatpush1.msra.mxu0 %v549
    %551 = vmatprep.subr.mxu0 0.0
    %v552 = vand.u32 %v53, 4294901760
    %v553 = vsub.f32 %v53, %v552
    %v554 = vand.u32 %v553, 4294901760
    %555 = vmatpush1.msra.mxu0 %v554
    %556 = vmatprep.subr.mxu0 0.0
    %v557 = vand.u32 %v54, 4294901760
    %v558 = vsub.f32 %v54, %v557
    %v559 = vand.u32 %v558, 4294901760
    %560 = vmatpush1.msra.mxu0 %v559
    %561 = vmatprep.subr.mxu0 0.0
    %v562 = vand.u32 %v55, 4294901760
    %v563 = vsub.f32 %v55, %v562
    %v564 = vand.u32 %v563, 4294901760
    %565 = vmatpush1.msra.mxu0 %v564
    %566 = vmatprep.subr.mxu0 0.0
    %v567 = vand.u32 %v56, 4294901760
    %v568 = vsub.f32 %v56, %v567
    %v569 = vand.u32 %v568, 4294901760
    %570 = vmatpush1.msra.mxu0 %v569
    %571 = vmatprep.subr.mxu0 0.0
    %v572 = vand.u32 %v57, 4294901760
    %v573 = vsub.f32 %v57, %v572
    %v574 = vand.u32 %v573, 4294901760
    %575 = vmatpush1.msra.mxu0 %v574
    %576 = vmatprep.subr.mxu0 0.0
    %v577 = vand.u32 %v58, 4294901760
    %v578 = vsub.f32 %v58, %v577
    %v579 = vand.u32 %v578, 4294901760
    %580 = vmatpush1.msra.mxu0 %v579
    %581 = vmatprep.subr.mxu0 0.0
    %v582 = vand.u32 %v59, 4294901760
    %v583 = vsub.f32 %v59, %v582
    %v584 = vand.u32 %v583, 4294901760
    %585 = vmatpush1.msra.mxu0 %v584
    %586 = vmatprep.subr.mxu0 0.0
    %v587 = vand.u32 %v60, 4294901760
    %v588 = vsub.f32 %v60, %v587
    %v589 = vand.u32 %v588, 4294901760
    %590 = vmatpush1.msra.mxu0 %v589
    %591 = vmatprep.subr.mxu0 0.0
    %v592 = vand.u32 %v61, 4294901760
    %v593 = vsub.f32 %v61, %v592
    %v594 = vand.u32 %v593, 4294901760
    %595 = vmatpush1.msra.mxu0 %v594
    %596 = vmatprep.subr.mxu0 0.0
    %v597 = vand.u32 %v62, 4294901760
    %v598 = vsub.f32 %v62, %v597
    %v599 = vand.u32 %v598, 4294901760
    %600 = vmatpush1.msra.mxu0 %v599
    %601 = vmatprep.subr.mxu0 0.0
    %v602 = vand.u32 %v63, 4294901760
    %v603 = vsub.f32 %v63, %v602
    %v604 = vand.u32 %v603, 4294901760
    %605 = vmatpush1.msra.mxu0 %v604
    %606 = vmatprep.subr.mxu0 0.0
    %v607 = vand.u32 %v64, 4294901760
    %v608 = vsub.f32 %v64, %v607
    %v609 = vand.u32 %v608, 4294901760
    %610 = vmatpush1.msra.mxu0 %v609
    %611 = vmatprep.subr.mxu0 0.0
    %612 = vmatpush1.msra.mxu0 0.0
    %613 = vmatprep.subr.mxu0 0.0
    %614 = vmatpush1.msra.mxu0 0.0
    %615 = vmatprep.subr.mxu0 0.0
    %616 = vmatpush1.msra.mxu0 0.0
    %617 = vmatprep.subr.mxu0 0.0
    %618 = vmatpush1.msra.mxu0 0.0
    %619 = vmatprep.subr.mxu0 0.0
    %620 = vmatpush1.msra.mxu0 0.0
    %621 = vmatprep.subr.mxu0 0.0
    %622 = vmatpush1.msra.mxu0 0.0
    %623 = vmatprep.subr.mxu0 0.0
    %624 = vmatpush1.msra.mxu0 0.0
    %625 = vmatprep.subr.mxu0 0.0
    %626 = vmatpush1.msra.mxu0 0.0
    %627 = vmatprep.subr.mxu0 0.0
    %628 = vmatpush1.msra.mxu0 0.0
    %629 = vmatprep.subr.mxu0 0.0
    %630 = vmatpush1.msra.mxu0 0.0
    %631 = vmatprep.subr.mxu0 0.0
    %632 = vmatpush1.msra.mxu0 0.0
    %633 = vmatprep.subr.mxu0 0.0
    %634 = vmatpush1.msra.mxu0 0.0
    %635 = vmatprep.subr.mxu0 0.0
    %636 = vmatpush1.msra.mxu0 0.0
    %637 = vmatprep.subr.mxu0 0.0
    %638 = vmatpush1.msra.mxu0 0.0
    %639 = vmatprep.subr.mxu0 0.0
    %640 = vmatpush1.msra.mxu0 0.0
    %641 = vmatprep.subr.mxu0 0.0
    %642 = vmatpush1.msra.mxu0 0.0
    %643 = vmatprep.mubr.f32.mxu0 0.0
    %v644 = vand.u32 %v47, 4294901760
    %645 = vmatmul.mubr.f32.gmra.mrb[0].mxu0 %v644
    %v646 = vpop.f32.mrb[0].mxu0
    %v647 = vadd.f32 %v520, %v646
    %v648 = vpop.f32.mrb[0].mxu0
    %649 = vmatprep.mubr.f32.mxu0 0.0
    %v650 = vand.u32 %v48, 4294901760
    %651 = vmatmul.mubr.f32.gmra.mrb[0].mxu0 %v650
    %v652 = vpop.f32.mrb[0].mxu0
    %v653 = vadd.f32 %v528, %v652
    %v654 = vpop.f32.mrb[0].mxu0
    %655 = vdwg.mxu0
    %656 = vmatprep.subr.mxu0 0.0
    %v657 = vand.u32 %v49, 4294901760
    %658 = vmatpush1.msra.mxu0 %v657
    %659 = vmatprep.subr.mxu0 0.0
    %v660 = vand.u32 %v50, 4294901760
    %661 = vmatpush1.msra.mxu0 %v660
    %662 = vmatprep.subr.mxu0 0.0
    %v663 = vand.u32 %v51, 4294901760
    %664 = vmatpush1.msra.mxu0 %v663
    %665 = vmatprep.subr.mxu0 0.0
    %v666 = vand.u32 %v52, 4294901760
    %667 = vmatpush1.msra.mxu0 %v666
    %668 = vmatprep.subr.mxu0 0.0
    %v669 = vand.u32 %v53, 4294901760
    %670 = vmatpush1.msra.mxu0 %v669
    %671 = vmatprep.subr.mxu0 0.0
    %v672 = vand.u32 %v54, 4294901760
    %673 = vmatpush1.msra.mxu0 %v672
    %674 = vmatprep.subr.mxu0 0.0
    %v675 = vand.u32 %v55, 4294901760
    %676 = vmatpush1.msra.mxu0 %v675
    %677 = vmatprep.subr.mxu0 0.0
    %v678 = vand.u32 %v56, 4294901760
    %679 = vmatpush1.msra.mxu0 %v678
    %680 = vmatprep.subr.mxu0 0.0
    %v681 = vand.u32 %v57, 4294901760
    %682 = vmatpush1.msra.mxu0 %v681
    %683 = vmatprep.subr.mxu0 0.0
    %v684 = vand.u32 %v58, 4294901760
    %685 = vmatpush1.msra.mxu0 %v684
    %686 = vmatprep.subr.mxu0 0.0
    %v687 = vand.u32 %v59, 4294901760
    %688 = vmatpush1.msra.mxu0 %v687
    %689 = vmatprep.subr.mxu0 0.0
    %v690 = vand.u32 %v60, 4294901760
    %691 = vmatpush1.msra.mxu0 %v690
    %692 = vmatprep.subr.mxu0 0.0
    %v693 = vand.u32 %v61, 4294901760
    %694 = vmatpush1.msra.mxu0 %v693
    %695 = vmatprep.subr.mxu0 0.0
    %v696 = vand.u32 %v62, 4294901760
    %697 = vmatpush1.msra.mxu0 %v696
    %698 = vmatprep.subr.mxu0 0.0
    %v699 = vand.u32 %v63, 4294901760
    %700 = vmatpush1.msra.mxu0 %v699
    %701 = vmatprep.subr.mxu0 0.0
    %v702 = vand.u32 %v64, 4294901760
    %703 = vmatpush1.msra.mxu0 %v702
    %704 = vmatprep.subr.mxu0 0.0
    %705 = vmatpush1.msra.mxu0 0.0
    %706 = vmatprep.subr.mxu0 0.0
    %707 = vmatpush1.msra.mxu0 0.0
    %708 = vmatprep.subr.mxu0 0.0
    %709 = vmatpush1.msra.mxu0 0.0
    %710 = vmatprep.subr.mxu0 0.0
    %711 = vmatpush1.msra.mxu0 0.0
    %712 = vmatprep.subr.mxu0 0.0
    %713 = vmatpush1.msra.mxu0 0.0
    %714 = vmatprep.subr.mxu0 0.0
    %715 = vmatpush1.msra.mxu0 0.0
    %716 = vmatprep.subr.mxu0 0.0
    %717 = vmatpush1.msra.mxu0 0.0
    %718 = vmatprep.subr.mxu0 0.0
    %719 = vmatpush1.msra.mxu0 0.0
    %720 = vmatprep.subr.mxu0 0.0
    %721 = vmatpush1.msra.mxu0 0.0
    %722 = vmatprep.subr.mxu0 0.0
    %723 = vmatpush1.msra.mxu0 0.0
    %724 = vmatprep.subr.mxu0 0.0
    %725 = vmatpush1.msra.mxu0 0.0
    %726 = vmatprep.subr.mxu0 0.0
    %727 = vmatpush1.msra.mxu0 0.0
    %728 = vmatprep.subr.mxu0 0.0
    %729 = vmatpush1.msra.mxu0 0.0
    %730 = vmatprep.subr.mxu0 0.0
    %731 = vmatpush1.msra.mxu0 0.0
    %732 = vmatprep.subr.mxu0 0.0
    %733 = vmatpush1.msra.mxu0 0.0
    %734 = vmatprep.subr.mxu0 0.0
    %735 = vmatpush1.msra.mxu0 0.0
    %736 = vmatprep.mubr.f32.mxu0 0.0
    %v737 = vand.u32 %v47, 4294901760
    %738 = vmatmul.mubr.f32.gmra.mrb[0].mxu0 %v737
    %v739 = vpop.f32.mrb[0].mxu0
    %v740 = vadd.f32 %v647, %v739
    %v741 = vpop.f32.mrb[0].mxu0
    %742 = vmatprep.mubr.f32.mxu0 0.0
    %v743 = vand.u32 %v48, 4294901760
    %744 = vmatmul.mubr.f32.gmra.mrb[0].mxu0 %v743
    %v745 = vpop.f32.mrb[0].mxu0
    %v746 = vadd.f32 %v653, %v745
    %v747 = vpop.f32.mrb[0].mxu0
    %748 = vdwg.mxu0
    %749 = vst [vmem:[#allocation5] sm:$0xff] %v740
    %750 = vst [vmem:[#allocation5 + $0x8] sm:$0xff] %v746
    %v751 = vld [vmem:[%s1] sm:$0xff]
    %v752 = vld [vmem:[%s1 + $0x8] sm:$0xff]
    %753 = vmax.xlane.f32.xlu0 %v740
    %v754 = vpop.xlane.xlu0 %753
    %755 = vmax.xlane.f32.xlu0 %v746
    %v756 = vpop.xlane.xlu0 %755
    %v757 = vsub.f32 %v740, %v754
    %v758 = vsub.f32 %v746, %v756
    %v759 = vmul.f32 %v757, 1.442695
    %v760 = vpow.pop %v759
    %v761 = vmul.f32 %v758, 1.442695
    %v762 = vpow.pop %v761
    %763 = vadd.xlane.f32.xlu0 %v760
    %v764 = vpop.xlane.xlu0 %763
    %765 = vadd.xlane.f32.xlu0 %v762
    %v766 = vpop.xlane.xlu0 %765
    %v767 = vlog2.pop %v764
    %v768 = vmul.f32 %v767, 0.6931472
    %v769 = vlog2.pop %v766
    %v770 = vmul.f32 %v769, 0.6931472
    %771 = vset.pattern.permute.xlu0 0
    %772 = vperm.xlu0 %771, %v751
    %v773 = vpop.permute.xlu0 %772
    %774 = vset.pattern.permute.xlu0 0
    %775 = vperm.xlu0 %774, %v752
    %v776 = vpop.permute.xlu0 %775
    %vm777 = vcmp.eq.s32.totalorder %v36, %v773
    %vm778 = vcmp.eq.s32.totalorder %v36, %v776
    %v779 = vsel %vm777, %v757, -1e+30
    %v780 = vsel %vm778, %v758, -1e+30
    %781 = vmax.xlane.f32.xlu0 %v779
    %v782 = vpop.xlane.xlu0 %781
    %783 = vmax.xlane.f32.xlu0 %v780
    %v784 = vpop.xlane.xlu0 %783
    %v785 = vsub.f32 %v768, %v782
    %v786 = vsub.f32 %v770, %v784
    %v787 = vlaneseq
    %v788 = vshrl.u32 %v787, 7
    %v789 = vadd.s32 %v788, 8
    %v790 = vstv %s32
    %v791 = vadd.s32 %v790, %v788
    %v792 = vadd.s32 %v790, %v789
    %vm793 = vcmp.lt.s32.totalorder %v791, 16
    %vm794 = vcmp.lt.s32.totalorder %v792, 16
    %v795 = vsel %vm793, %v785, 0.0
    %v796 = vsel %vm794, %v786, 0.0
    %v797 = vadd.f32 %v795, %v796
    %v798 = vrot.slane %v797, 4
    %v799 = vadd.f32 %v797, %v798
    %v800 = vrot.slane %v799, 2
    %v801 = vadd.f32 %v799, %v800
    %v802 = vrot.slane %v801, 1
    %v803 = vadd.f32 %v801, %v802
    %804 = vst [vmem:[#allocation6] sm:$0xff] %v803
    // Predicated region
    $region18: #{tpu_custom_call.1} parent=1 // pred_check
      _
    $region19: #{tpu_custom_call.1} parent=1 // pred_check_branch
      %806 = sbr.rel (0) target = $region21
    $region20: #{tpu_custom_call.1} parent=1 // pred_region
      %s808 = ssub.s32 256, 256
      %809 = vsyncadd [#allocation4], %s808
      %s810 = sshll.u32 [#allocation5], 4
      %s811 = int_to_ptr.vmem [resolvable:$true] %s810
      %816 = dma.vmem_to_hbm [thread:$0]  %s811, 256, %s3, [#allocation4], 128, 128, 8
    $region21: #{tpu_custom_call.1} parent=1 // pred_fallthru
      _
    // Predicated region
    $region22: #{tpu_custom_call.1} parent=1 // pred_check
      _
    $region23: #{tpu_custom_call.1} parent=1 // pred_check_branch
      %818 = sbr.rel (0) target = $region25
    $region24: #{tpu_custom_call.1} parent=1 // pred_region
      %s820 = ssub.s32 128, 128
      %821 = vsyncadd [#allocation7], %s820
      %s823 = sshll.u32 [#allocation6], 4
      %s824 = int_to_ptr.vmem [resolvable:$true] %s823
      %826 = dma.vmem_to_hbm [thread:$0]  %s824, 128, %s4, [#allocation7]
    $region25: #{tpu_custom_call.1} parent=1 // pred_fallthru
      _
    // Predicated region
    $region26: #{tpu_custom_call.1} parent=1 // pred_check
      _
    $region27: #{tpu_custom_call.1} parent=1 // pred_check_branch
      %828 = sbr.rel (0) target = $region29
    $region28: #{tpu_custom_call.1} parent=1 // pred_region
      %829 = dma.done [#allocation4], 256
    $region29: #{tpu_custom_call.1} parent=1 // pred_fallthru
      _
    // Predicated region
    $region30: #{tpu_custom_call.1} parent=1 // pred_check
      _
    $region31: #{tpu_custom_call.1} parent=1 // pred_check_branch
      %831 = sbr.rel (0) target = $region33
    $region32: #{tpu_custom_call.1} parent=1 // pred_region
      %832 = dma.done [#allocation7], 128
    $region33: #{tpu_custom_call.1} parent=1 // pred_fallthru
      _
    %833 = vsyncpa [#allocation3], 1
    %834 = vsyncpa [#allocation4], 1
    %835 = vsyncpa [#allocation7], 1

</llo_original>
